<compile_context>
chip_gen: v7x
topology: tpu7x:2x2x1
jax: 0.10.0
libtpu: 0.0.40
codegen_flags: <defaults>
</compile_context>

<pallas_src>
import jax
import jax.numpy as jnp
from jax.experimental import pallas as pl
from jax.experimental.pallas import tpu as pltpu


# ----------------------------- Pallas kernels ----------------------------- #

def _swish_f32(acc):
    # sigmoid via exp + approx reciprocal: both land on the EUP slot.
    # (approx=True makes swish slightly approximate vs torch SiLU.)
    return acc * pl.reciprocal(1.0 + jnp.exp(-acc), approx=True)


def _conv_pair_kernel_body(p_in_ref, p_tg_ref, w_ref, b_ref):
    w = w_ref[...]
    b = b_ref[...]
    acc_i = jnp.dot(p_in_ref[...], w, preferred_element_type=jnp.float32) + b
    acc_t = jnp.dot(p_tg_ref[...], w, preferred_element_type=jnp.float32) + b
    return _swish_f32(acc_i), _swish_f32(acc_t)


def _conv_pair_l1_feat_kernel(p_in_ref, p_tg_ref, w_ref, b_ref,
                              fin_ref, ftg_ref, l1_ref):
    """Stage with feature writeback: f = swish(P @ W + b) for both halves,
    write bf16 features, and emit the per-tile L1 partial sum."""
    f_i, f_t = _conv_pair_kernel_body(p_in_ref, p_tg_ref, w_ref, b_ref)
    fin_ref[...] = f_i.astype(fin_ref.dtype)
    ftg_ref[...] = f_t.astype(ftg_ref.dtype)
    l1_ref[0, 0] = jnp.sum(jnp.abs(f_i - f_t))


def _conv_pair_l1_kernel(p_in_ref, p_tg_ref, w_ref, b_ref, l1_ref):
    """L1-only stage: features never leave VMEM (no HBM writeback)."""
    f_i, f_t = _conv_pair_kernel_body(p_in_ref, p_tg_ref, w_ref, b_ref)
    l1_ref[0, 0] = jnp.sum(jnp.abs(f_i - f_t))


# ------------------------------- wrappers --------------------------------- #

def _im2col_3x3_s2(x_nhwc):
    """3x3 / stride-2 / pad-1 patches: (N,H,W,C) -> (N*Ho*Wo, 9*C) bf16."""
    n, h, w, c = x_nhwc.shape
    ho, wo = h // 2, w // 2
    xp = jnp.pad(x_nhwc.astype(jnp.bfloat16), ((0, 0), (1, 1), (1, 1), (0, 0)))
    cols = [xp[:, ky:ky + 2 * ho:2, kx:kx + 2 * wo:2, :]
            for ky in range(3) for kx in range(3)]
    patches = jnp.concatenate(cols, axis=-1).reshape(n * ho * wo, 9 * c)
    return patches, ho, wo


def conv3x3_s2_swish_pair(x_in, x_tg, w, b, *, tm=512, want_features=True):
    """Fused: conv3x3/s2/p1 + swish on BOTH images + L1(|f_in - f_tg|) mean.

    x_*: (N,H,W,Cin)   w: (3,3,Cin,Cout)   b: (Cout,)
    Returns (f_in, f_tg, l1_mean); features are (N,Ho,Wo,Cout) bf16 (real,
    unpadded channels) or None when want_features=False.
    Padded rows/channels are exactly identical between the two halves, so
    they contribute 0 to the L1 sum.
    """
    n, h, wd, cin = x_in.shape
    cout = w.shape[-1]

    p_in, ho, wo = _im2col_3x3_s2(x_in)
    p_tg, _, _ = _im2col_3x3_s2(x_tg)

    m = n * ho * wo
    k = 9 * cin
    kp = pl.cdiv(k, 128) * 128            # lane-dense K
    np_out = pl.cdiv(cout, 128) * 128     # lane-dense Cout

    # Large M tile (review: 512-1024); multiple of 8, clamped for small M.
    tm = max(8, min(tm, pl.cdiv(m, 8) * 8))
    m_pad = pl.cdiv(m, tm) * tm
    grid = m_pad // tm

    # Zero-pad rows and K so every tile is fully defined (padded rows give
    # identical swish(bias) in both halves -> zero L1 contribution).
    p_in = jnp.pad(p_in, ((0, m_pad - m), (0, kp - k)))
    p_tg = jnp.pad(p_tg, ((0, m_pad - m), (0, kp - k)))
    w2 = jnp.pad(w.reshape(k, cout).astype(jnp.bfloat16),
                 ((0, kp - k), (0, np_out - cout)))
    b2 = jnp.pad(b.reshape(1, cout).astype(jnp.float32),
                 ((0, 0), (0, np_out - cout)))

    feat_bytes = 2 * m_pad * np_out * 2 if want_features else 0
    cost = pl.CostEstimate(
        flops=2 * 2 * m_pad * kp * np_out,
        transcendentals=2 * m_pad * np_out,
        bytes_accessed=2 * m_pad * kp * 2 + kp * np_out * 2 + np_out * 4
        + feat_bytes + grid * 4,
    )

    in_specs = [
        pl.BlockSpec((tm, kp), lambda i: (i, 0)),        # input-half patches
        pl.BlockSpec((tm, kp), lambda i: (i, 0)),        # target-half patches
        pl.BlockSpec((kp, np_out), lambda i: (0, 0)),    # weights (resident)
        pl.BlockSpec((1, np_out), lambda i: (0, 0)),     # bias (resident)
    ]
    l1_spec = pl.BlockSpec((1, 1), lambda i: (i, 0), memory_space=pltpu.SMEM)
    l1_shape = jax.ShapeDtypeStruct((grid, 1), jnp.float32)

    cparams = pltpu.CompilerParams(
        dimension_semantics=("parallel",),               # shards M tiles on v7x
        vmem_limit_bytes=48 * 1024 * 1024,
    )

    if want_features:
        f_spec = pl.BlockSpec((tm, np_out), lambda i: (i, 0))
        f_shape = jax.ShapeDtypeStruct((m_pad, np_out), jnp.bfloat16)
        f_in, f_tg, l1 = pl.pallas_call(
            _conv_pair_l1_feat_kernel,
            out_shape=(f_shape, f_shape, l1_shape),
            grid=(grid,),
            in_specs=in_specs,
            out_specs=(f_spec, f_spec, l1_spec),
            compiler_params=cparams,
            cost_estimate=cost,
        )(p_in, p_tg, w2, b2)
        # Slice away padded rows AND padded channels before the next stage
        # (review: avoids the 9x-wider K in the following conv).
        f_in = f_in[:m, :cout].reshape(n, ho, wo, cout)
        f_tg = f_tg[:m, :cout].reshape(n, ho, wo, cout)
    else:
        f_in = f_tg = None
        l1 = pl.pallas_call(
            _conv_pair_l1_kernel,
            out_shape=l1_shape,
            grid=(grid,),
            in_specs=in_specs,
            out_specs=l1_spec,
            compiler_params=cparams,
            cost_estimate=cost,
        )(p_in, p_tg, w2, b2)

    l1_mean = jnp.sum(l1) / jnp.float32(m * cout)
    return f_in, f_tg, l1_mean


def effi_perceptual_loss(inp, tgt, params):
    """loss = l1(enc1(inp), enc1(tgt)) + l1(enc2(inp), enc2(tgt))."""
    x_in = jnp.transpose(inp, (0, 2, 3, 1))   # NCHW -> NHWC
    x_tg = jnp.transpose(tgt, (0, 2, 3, 1))

    # Stage 1: features needed by stage 2 -> write bf16 features + fused L1.
    f1_in, f1_tg, loss1 = conv3x3_s2_swish_pair(
        x_in, x_tg, params["w1"], params["b1"], want_features=True)

    # Stage 2: features consumed only by the L1 -> L1-only kernel, no f2
    # writeback to HBM.
    _, _, loss2 = conv3x3_s2_swish_pair(
        f1_in, f1_tg, params["w2"], params["b2"], want_features=False)

    return loss1 + loss2


# --------------------------------- main ------------------------------------ #

if __name__ == "__main__":
    key = jax.random.PRNGKey(0)
    k_in, k_tg, k_w1, k_b1, k_w2, k_b2 = jax.random.split(key, 6)

    # small shapes consistent with the forward: NCHW image pairs
    N, C, H, W = 2, 3, 16, 16
    x = jax.random.normal(k_in, (N, C, H, W), jnp.float32)
    y = jax.random.normal(k_tg, (N, C, H, W), jnp.float32)

    # deterministic synthetic encoder weights (stem 3->32, block 32->16)
    params = {
        "w1": 0.1 * jax.random.normal(k_w1, (3, 3, 3, 32), jnp.float32),
        "b1": 0.1 * jax.random.normal(k_b1, (32,), jnp.float32),
        "w2": 0.1 * jax.random.normal(k_w2, (3, 3, 32, 16), jnp.float32),
        "b2": 0.1 * jax.random.normal(k_b2, (16,), jnp.float32),
    }

    loss = jax.jit(effi_perceptual_loss)(x, y, params)
    jax.block_until_ready(loss)
    assert loss.shape == () and bool(jnp.isfinite(loss))
    print("KERNEL_OK")
</pallas_src>

<mosaic_0001>
module attributes {stable_mosaic.version = 11 : i64} {
  func.func @_conv_pair_l1_feat_kernel(%arg0: i32, %arg1: memref<128x128xbf16, #tpu.memory_space<vmem>>, %arg2: memref<128x128xbf16, #tpu.memory_space<vmem>>, %arg3: memref<128x128xbf16, #tpu.memory_space<vmem>>, %arg4: memref<1x128xf32, #tpu.memory_space<vmem>>, %arg5: memref<128x128xbf16, #tpu.memory_space<vmem>>, %arg6: memref<128x128xbf16, #tpu.memory_space<vmem>>, %arg7: memref<1x1xf32, #tpu.memory_space<smem>>) attributes {dimension_semantics = [#tpu.dimension_semantics<parallel>], iteration_bounds = array<i64: 1>, scalar_prefetch = 0 : i64, scratch_operands = 0 : i64, tpu.core_type = #tpu.core_type<tc>, window_params = [{transform_indices = @transform_0, window_bounds = array<i64: 128, 128>}, {transform_indices = @transform_1, window_bounds = array<i64: 128, 128>}, {pipeline_mode = #tpu.pipeline_mode<synchronous>, transform_indices = @transform_2, window_bounds = array<i64: 128, 128>}, {pipeline_mode = #tpu.pipeline_mode<synchronous>, transform_indices = @transform_3, window_bounds = array<i64: 1, 128>}, {transform_indices = @transform_4, window_bounds = array<i64: 128, 128>}, {transform_indices = @transform_5, window_bounds = array<i64: 128, 128>}, {transform_indices = @transform_6, window_bounds = array<i64: 1, 1>}]} {
    %c0 = arith.constant 0 : index
    %c0_0 = arith.constant 0 : index
    %0 = vector.load %arg3[%c0, %c0_0] : memref<128x128xbf16, #tpu.memory_space<vmem>>, vector<128x128xbf16>
    %c0_1 = arith.constant 0 : index
    %c0_2 = arith.constant 0 : index
    %1 = vector.load %arg4[%c0_1, %c0_2] : memref<1x128xf32, #tpu.memory_space<vmem>>, vector<1x128xf32>
    %c0_3 = arith.constant 0 : index
    %c0_4 = arith.constant 0 : index
    %2 = vector.load %arg1[%c0_3, %c0_4] : memref<128x128xbf16, #tpu.memory_space<vmem>>, vector<128x128xbf16>
    %cst = arith.constant dense<0.000000e+00> : vector<128x128xf32>
    %3 = tpu.matmul %2, %0, %cst {dimension_numbers = #tpu.dot_dimension_numbers<[1], [0], [0], [1], [0, 0, 1, 1], [], []>} : vector<128x128xbf16>, vector<128x128xbf16>, vector<128x128xf32> -> vector<128x128xf32>
    %4 = vector.broadcast %1 : vector<1x128xf32> to vector<128x128xf32>
    %5 = arith.addf %3, %4 : vector<128x128xf32>
    %c0_5 = arith.constant 0 : index
    %c0_6 = arith.constant 0 : index
    %6 = vector.load %arg2[%c0_5, %c0_6] : memref<128x128xbf16, #tpu.memory_space<vmem>>, vector<128x128xbf16>
    %cst_7 = arith.constant dense<0.000000e+00> : vector<128x128xf32>
    %7 = tpu.matmul %6, %0, %cst_7 {dimension_numbers = #tpu.dot_dimension_numbers<[1], [0], [0], [1], [0, 0, 1, 1], [], []>} : vector<128x128xbf16>, vector<128x128xbf16>, vector<128x128xf32> -> vector<128x128xf32>
    %8 = vector.broadcast %1 : vector<1x128xf32> to vector<128x128xf32>
    %9 = arith.addf %7, %8 : vector<128x128xf32>
    %cst_8 = arith.constant 0.000000e+00 : f32
    %10 = vector.broadcast %cst_8 : f32 to vector<128x128xf32>
    %11 = arith.subf %10, %5 : vector<128x128xf32>
    %12 = math.exp %11 : vector<128x128xf32>
    %cst_9 = arith.constant 1.000000e+00 : f32
    %13 = vector.broadcast %cst_9 : f32 to vector<128x128xf32>
    %14 = arith.addf %13, %12 : vector<128x128xf32>
    %15 = tpu.reciprocal %14 {approx = true} : vector<128x128xf32> -> vector<128x128xf32>
    %16 = arith.mulf %5, %15 : vector<128x128xf32>
    %cst_10 = arith.constant 0.000000e+00 : f32
    %17 = vector.broadcast %cst_10 : f32 to vector<128x128xf32>
    %18 = arith.subf %17, %9 : vector<128x128xf32>
    %19 = math.exp %18 : vector<128x128xf32>
    %cst_11 = arith.constant 1.000000e+00 : f32
    %20 = vector.broadcast %cst_11 : f32 to vector<128x128xf32>
    %21 = arith.addf %20, %19 : vector<128x128xf32>
    %22 = tpu.reciprocal %21 {approx = true} : vector<128x128xf32> -> vector<128x128xf32>
    %23 = arith.mulf %9, %22 : vector<128x128xf32>
    %24 = arith.truncf %16 : vector<128x128xf32> to vector<128x128xbf16>
    %c0_12 = arith.constant 0 : index
    %c0_13 = arith.constant 0 : index
    %25 = vector.load %arg5[%c0_12, %c0_13] : memref<128x128xbf16, #tpu.memory_space<vmem>>, vector<128x128xbf16>
    tpu.vector_store %arg5[%c0_12, %c0_13], %24 {strides = array<i32>} : memref<128x128xbf16, #tpu.memory_space<vmem>>, vector<128x128xbf16>,
    %26 = arith.truncf %23 : vector<128x128xf32> to vector<128x128xbf16>
    %c0_14 = arith.constant 0 : index
    %c0_15 = arith.constant 0 : index
    %27 = vector.load %arg6[%c0_14, %c0_15] : memref<128x128xbf16, #tpu.memory_space<vmem>>, vector<128x128xbf16>
    tpu.vector_store %arg6[%c0_14, %c0_15], %26 {strides = array<i32>} : memref<128x128xbf16, #tpu.memory_space<vmem>>, vector<128x128xbf16>,
    %28 = arith.subf %16, %23 : vector<128x128xf32>
    %29 = math.absf %28 : vector<128x128xf32>
    %30 = vector.shape_cast %29 : vector<128x128xf32> to vector<1x128x128xf32>
    %cst_16 = arith.constant dense<0.000000e+00> : vector<1xf32>
    %31 = vector.multi_reduction <add>, %30, %cst_16 [1, 2] : vector<1x128x128xf32> to vector<1xf32>
    %32 = vector.shape_cast %31 : vector<1xf32> to vector<1x1x1xf32>
    %33 = vector.extract %32[0, 0, 0] : f32 from vector<1x1x1xf32>
    %c0_17 = arith.constant 0 : index
    %c0_18 = arith.constant 0 : index
    %34 = memref.load %arg7[%c0_17, %c0_18] : memref<1x1xf32, #tpu.memory_space<smem>>
    memref.store %33, %arg7[%c0_17, %c0_18] : memref<1x1xf32, #tpu.memory_space<smem>>
    return
  }
  func.func @transform_0(%arg0: i32) -> (i32, i32) {
    %c0_i32 = arith.constant 0 : i32
    %c0_i32_0 = arith.constant 0 : i32
    return %arg0, %c0_i32 : i32, i32
  }
  func.func @transform_1(%arg0: i32) -> (i32, i32) {
    %c0_i32 = arith.constant 0 : i32
    %c0_i32_0 = arith.constant 0 : i32
    return %arg0, %c0_i32 : i32, i32
  }
  func.func @transform_2(%arg0: i32) -> (i32, i32) {
    %c0_i32 = arith.constant 0 : i32
    %c0_i32_0 = arith.constant 0 : i32
    %c0_i32_1 = arith.constant 0 : i32
    return %c0_i32, %c0_i32_0 : i32, i32
  }
  func.func @transform_3(%arg0: i32) -> (i32, i32) {
    %c0_i32 = arith.constant 0 : i32
    %c0_i32_0 = arith.constant 0 : i32
    %c0_i32_1 = arith.constant 0 : i32
    return %c0_i32, %c0_i32_0 : i32, i32
  }
  func.func @transform_4(%arg0: i32) -> (i32, i32) {
    %c0_i32 = arith.constant 0 : i32
    %c0_i32_0 = arith.constant 0 : i32
    return %arg0, %c0_i32 : i32, i32
  }
  func.func @transform_5(%arg0: i32) -> (i32, i32) {
    %c0_i32 = arith.constant 0 : i32
    %c0_i32_0 = arith.constant 0 : i32
    return %arg0, %c0_i32 : i32, i32
  }
  func.func @transform_6(%arg0: i32) -> (i32, i32) {
    %c0_i32 = arith.constant 0 : i32
    %c0_i32_0 = arith.constant 0 : i32
    return %arg0, %c0_i32 : i32, i32
  }
}

module attributes {stable_mosaic.version = 11 : i64} {
  func.func @_conv_pair_l1_kernel(%arg0: i32, %arg1: memref<32x384xbf16, #tpu.memory_space<vmem>>, %arg2: memref<32x384xbf16, #tpu.memory_space<vmem>>, %arg3: memref<384x128xbf16, #tpu.memory_space<vmem>>, %arg4: memref<1x128xf32, #tpu.memory_space<vmem>>, %arg5: memref<1x1xf32, #tpu.memory_space<smem>>) attributes {dimension_semantics = [#tpu.dimension_semantics<parallel>], iteration_bounds = array<i64: 1>, scalar_prefetch = 0 : i64, scratch_operands = 0 : i64, tpu.core_type = #tpu.core_type<tc>, window_params = [{transform_indices = @transform_0, window_bounds = array<i64: 32, 384>}, {transform_indices = @transform_1, window_bounds = array<i64: 32, 384>}, {pipeline_mode = #tpu.pipeline_mode<synchronous>, transform_indices = @transform_2, window_bounds = array<i64: 384, 128>}, {pipeline_mode = #tpu.pipeline_mode<synchronous>, transform_indices = @transform_3, window_bounds = array<i64: 1, 128>}, {transform_indices = @transform_4, window_bounds = array<i64: 1, 1>}]} {
    %c0 = arith.constant 0 : index
    %c0_0 = arith.constant 0 : index
    %0 = vector.load %arg3[%c0, %c0_0] : memref<384x128xbf16, #tpu.memory_space<vmem>>, vector<384x128xbf16>
    %c0_1 = arith.constant 0 : index
    %c0_2 = arith.constant 0 : index
    %1 = vector.load %arg4[%c0_1, %c0_2] : memref<1x128xf32, #tpu.memory_space<vmem>>, vector<1x128xf32>
    %c0_3 = arith.constant 0 : index
    %c0_4 = arith.constant 0 : index
    %2 = vector.load %arg1[%c0_3, %c0_4] : memref<32x384xbf16, #tpu.memory_space<vmem>>, vector<32x384xbf16>
    %cst = arith.constant dense<0.000000e+00> : vector<32x128xf32>
    %3 = tpu.matmul %2, %0, %cst {dimension_numbers = #tpu.dot_dimension_numbers<[1], [0], [0], [1], [0, 0, 1, 1], [], []>} : vector<32x384xbf16>, vector<384x128xbf16>, vector<32x128xf32> -> vector<32x128xf32>
    %4 = vector.broadcast %1 : vector<1x128xf32> to vector<32x128xf32>
    %5 = arith.addf %3, %4 : vector<32x128xf32>
    %c0_5 = arith.constant 0 : index
    %c0_6 = arith.constant 0 : index
    %6 = vector.load %arg2[%c0_5, %c0_6] : memref<32x384xbf16, #tpu.memory_space<vmem>>, vector<32x384xbf16>
    %cst_7 = arith.constant dense<0.000000e+00> : vector<32x128xf32>
    %7 = tpu.matmul %6, %0, %cst_7 {dimension_numbers = #tpu.dot_dimension_numbers<[1], [0], [0], [1], [0, 0, 1, 1], [], []>} : vector<32x384xbf16>, vector<384x128xbf16>, vector<32x128xf32> -> vector<32x128xf32>
    %8 = vector.broadcast %1 : vector<1x128xf32> to vector<32x128xf32>
    %9 = arith.addf %7, %8 : vector<32x128xf32>
    %cst_8 = arith.constant 0.000000e+00 : f32
    %10 = vector.broadcast %cst_8 : f32 to vector<32x128xf32>
    %11 = arith.subf %10, %5 : vector<32x128xf32>
    %12 = math.exp %11 : vector<32x128xf32>
    %cst_9 = arith.constant 1.000000e+00 : f32
    %13 = vector.broadcast %cst_9 : f32 to vector<32x128xf32>
    %14 = arith.addf %13, %12 : vector<32x128xf32>
    %15 = tpu.reciprocal %14 {approx = true} : vector<32x128xf32> -> vector<32x128xf32>
    %16 = arith.mulf %5, %15 : vector<32x128xf32>
    %cst_10 = arith.constant 0.000000e+00 : f32
    %17 = vector.broadcast %cst_10 : f32 to vector<32x128xf32>
    %18 = arith.subf %17, %9 : vector<32x128xf32>
    %19 = math.exp %18 : vector<32x128xf32>
    %cst_11 = arith.constant 1.000000e+00 : f32
    %20 = vector.broadcast %cst_11 : f32 to vector<32x128xf32>
    %21 = arith.addf %20, %19 : vector<32x128xf32>
    %22 = tpu.reciprocal %21 {approx = true} : vector<32x128xf32> -> vector<32x128xf32>
    %23 = arith.mulf %9, %22 : vector<32x128xf32>
    %24 = arith.subf %16, %23 : vector<32x128xf32>
    %25 = math.absf %24 : vector<32x128xf32>
    %26 = vector.shape_cast %25 : vector<32x128xf32> to vector<1x32x128xf32>
    %cst_12 = arith.constant dense<0.000000e+00> : vector<1xf32>
    %27 = vector.multi_reduction <add>, %26, %cst_12 [1, 2] : vector<1x32x128xf32> to vector<1xf32>
    %28 = vector.shape_cast %27 : vector<1xf32> to vector<1x1x1xf32>
    %29 = vector.extract %28[0, 0, 0] : f32 from vector<1x1x1xf32>
    %c0_13 = arith.constant 0 : index
    %c0_14 = arith.constant 0 : index
    %30 = memref.load %arg5[%c0_13, %c0_14] : memref<1x1xf32, #tpu.memory_space<smem>>
    memref.store %29, %arg5[%c0_13, %c0_14] : memref<1x1xf32, #tpu.memory_space<smem>>
    return
  }
  func.func @transform_0(%arg0: i32) -> (i32, i32) {
    %c0_i32 = arith.constant 0 : i32
    %c0_i32_0 = arith.constant 0 : i32
    return %arg0, %c0_i32 : i32, i32
  }
  func.func @transform_1(%arg0: i32) -> (i32, i32) {
    %c0_i32 = arith.constant 0 : i32
    %c0_i32_0 = arith.constant 0 : i32
    return %arg0, %c0_i32 : i32, i32
  }
  func.func @transform_2(%arg0: i32) -> (i32, i32) {
    %c0_i32 = arith.constant 0 : i32
    %c0_i32_0 = arith.constant 0 : i32
    %c0_i32_1 = arith.constant 0 : i32
    return %c0_i32, %c0_i32_0 : i32, i32
  }
  func.func @transform_3(%arg0: i32) -> (i32, i32) {
    %c0_i32 = arith.constant 0 : i32
    %c0_i32_0 = arith.constant 0 : i32
    %c0_i32_1 = arith.constant 0 : i32
    return %c0_i32, %c0_i32_0 : i32, i32
  }
  func.func @transform_4(%arg0: i32) -> (i32, i32) {
    %c0_i32 = arith.constant 0 : i32
    %c0_i32_0 = arith.constant 0 : i32
    return %arg0, %c0_i32 : i32, i32
  }
}

</mosaic_0001>

<llo_original>
// kernel: effi_perceptual_loss.2
$region0: #{effi_perceptual_loss.2}
  #allocation0 [shape = 'u32[]', space=smem, size = 0x4, offset = 0x4, fixed_abs, tag = 'smem constant byte address 0x4 - core index']
  #allocation1 [shape = 'u32[144,128]{1,0:T(1,128)}', space=vmem, size = 0x12000, scoped, tag = 'internal scratch']
  %s0 = inlined_call_operand.vmem [shape: bf16[128,128], index: 0, kind: input, shape index: {}]
  %s1 = inlined_call_operand.vmem [shape: bf16[128,128], index: 1, kind: input, shape index: {}]
  %s2 = inlined_call_operand.vmem [shape: bf16[128,128], index: 2, kind: input, shape index: {}]
  %s3 = inlined_call_operand.vmem [shape: f32[1,128], index: 3, kind: input, shape index: {}]
  %s4 = inlined_call_operand.vmem [shape: bf16[128,128], index: 4, kind: output, shape index: {0}]
  %s5 = inlined_call_operand.vmem [shape: bf16[128,128], index: 5, kind: output, shape index: {1}]
  %s6 = inlined_call_operand.hbm [shape: f32[1,1], index: 6, kind: output, shape index: {2}]
  %7 = xla_tuple %s4, %s5, %s6
  %s8 = sld [smem:[#allocation0]]
  $region42: #{effi_perceptual_loss.2} parent=0
    _
  %s10 = ssub.s32 1, %s8
  %s11 = scalar_select 0, %s10, %s8
  $region1: #{effi_perceptual_loss.2} parent=0
    #allocation2 [shape = 'u8[512]{0}', space=smem, size = 0x200, scoped, tag = 'output window, operand 2, single buffered']
    #allocation3 [shape = 's32[1]{0}', space=sflag, size = 0x4, scoped, tag = 'scoped memory for effi_perceptual_loss.2']
    %12 = vsyncpa [#allocation3], 0
    // Predicated region
    $region2: #{effi_perceptual_loss.2} parent=1 // pred_check
      _
    $region3: #{effi_perceptual_loss.2} parent=1 // pred_check_branch
      %14 = sbr.rel (0) target = $region5
    $region4: #{effi_perceptual_loss.2} parent=1 // pred_region
      _
    $region5: #{effi_perceptual_loss.2} parent=1 // pred_fallthru
      _
    // Predicated region
    $region6: #{effi_perceptual_loss.2} parent=1 // pred_check
      _
    $region7: #{effi_perceptual_loss.2} parent=1 // pred_check_branch
      %16 = sbr.rel (0) target = $region9
    $region8: #{effi_perceptual_loss.2} parent=1 // pred_region
      _
    $region9: #{effi_perceptual_loss.2} parent=1 // pred_fallthru
      _
    // Predicated region
    $region10: #{effi_perceptual_loss.2} parent=1 // pred_check
      _
    $region11: #{effi_perceptual_loss.2} parent=1 // pred_check_branch
      %18 = sbr.rel (0) target = $region13
    $region12: #{effi_perceptual_loss.2} parent=1 // pred_region
      _
    $region13: #{effi_perceptual_loss.2} parent=1 // pred_fallthru
      _
    // Predicated region
    $region14: #{effi_perceptual_loss.2} parent=1 // pred_check
      _
    $region15: #{effi_perceptual_loss.2} parent=1 // pred_check_branch
      %20 = sbr.rel (0) target = $region17
    $region16: #{effi_perceptual_loss.2} parent=1 // pred_region
      _
    $region17: #{effi_perceptual_loss.2} parent=1 // pred_fallthru
      _
    %v22 = vld [vmem:[%s2] sm:$0xf]
    %v23 = vld [vmem:[%s2 + $0x4] sm:$0xf]
    %v24 = vld [vmem:[%s2 + $0x8] sm:$0xf]
    %v25 = vld [vmem:[%s2 + $0xc] sm:$0xf]
    %v26 = vld [vmem:[%s2 + $0x10] sm:$0xf]
    %v27 = vld [vmem:[%s2 + $0x14] sm:$0xf]
    %v28 = vld [vmem:[%s2 + $0x18] sm:$0xf]
    %v29 = vld [vmem:[%s2 + $0x1c] sm:$0xf]
    %v30 = vld [vmem:[%s2 + $0x20] sm:$0xf]
    %v31 = vld [vmem:[%s2 + $0x24] sm:$0xf]
    %v32 = vld [vmem:[%s2 + $0x28] sm:$0xf]
    %v33 = vld [vmem:[%s2 + $0x2c] sm:$0xf]
    %v34 = vld [vmem:[%s2 + $0x30] sm:$0xf]
    %v35 = vld [vmem:[%s2 + $0x34] sm:$0xf]
    %v36 = vld [vmem:[%s2 + $0x38] sm:$0xf]
    %v37 = vld [vmem:[%s2 + $0x3c] sm:$0xf]
    %v38 = vld [vmem:[%s3] sm:$0x1]
    %v39 = vld [vmem:[%s0] sm:$0xf]
    %v40 = vld [vmem:[%s0 + $0x4] sm:$0xf]
    %v41 = vld [vmem:[%s0 + $0x8] sm:$0xf]
    %v42 = vld [vmem:[%s0 + $0xc] sm:$0xf]
    %v43 = vld [vmem:[%s0 + $0x10] sm:$0xf]
    %v44 = vld [vmem:[%s0 + $0x14] sm:$0xf]
    %v45 = vld [vmem:[%s0 + $0x18] sm:$0xf]
    %v46 = vld [vmem:[%s0 + $0x1c] sm:$0xf]
    %v47 = vld [vmem:[%s0 + $0x20] sm:$0xf]
    %v48 = vld [vmem:[%s0 + $0x24] sm:$0xf]
    %v49 = vld [vmem:[%s0 + $0x28] sm:$0xf]
    %v50 = vld [vmem:[%s0 + $0x2c] sm:$0xf]
    %v51 = vld [vmem:[%s0 + $0x30] sm:$0xf]
    %v52 = vld [vmem:[%s0 + $0x34] sm:$0xf]
    %v53 = vld [vmem:[%s0 + $0x38] sm:$0xf]
    %v54 = vld [vmem:[%s0 + $0x3c] sm:$0xf]
    %v56 = vlaneseq
    %v57 = vshrl.u32 %v56, 7
    %v58 = vsub.s32 0, %v57
    %v59 = vrot.slane %v38, %v58
    %v77 = vunpack.c.l.b16 %v39
    %v78 = vunpack.c.l.b16 %v40
    %v79 = vunpack.c.l.b16 %v41
    %v80 = vunpack.c.l.b16 %v42
    %v81 = vunpack.c.l.b16 %v43
    %v82 = vunpack.c.l.b16 %v44
    %v83 = vunpack.c.l.b16 %v45
    %v84 = vunpack.c.l.b16 %v46
    %v85 = vunpack.c.l.b16 %v47
    %v86 = vunpack.c.l.b16 %v48
    %v87 = vunpack.c.l.b16 %v49
    %v88 = vunpack.c.l.b16 %v50
    %v89 = vunpack.c.l.b16 %v51
    %v90 = vunpack.c.l.b16 %v52
    %v91 = vunpack.c.l.b16 %v53
    %v92 = vunpack.c.l.b16 %v54
    %v93 = vpack.c.b16 %v78, %v77
    %v94 = vpack.c.b16 %v80, %v79
    %v95 = vpack.c.b16 %v82, %v81
    %v96 = vpack.c.b16 %v84, %v83
    %v97 = vpack.c.b16 %v86, %v85
    %v98 = vpack.c.b16 %v88, %v87
    %v99 = vpack.c.b16 %v90, %v89
    %v100 = vpack.c.b16 %v92, %v91
    %v125 = vunpack.c.l.b16 %v22
    %v126 = vunpack.c.l.b16 %v23
    %v127 = vunpack.c.l.b16 %v24
    %v128 = vunpack.c.l.b16 %v25
    %v129 = vunpack.c.l.b16 %v26
    %v130 = vunpack.c.l.b16 %v27
    %v131 = vunpack.c.l.b16 %v28
    %v132 = vunpack.c.l.b16 %v29
    %v133 = vunpack.c.l.b16 %v30
    %v134 = vunpack.c.l.b16 %v31
    %v135 = vunpack.c.l.b16 %v32
    %v136 = vunpack.c.l.b16 %v33
    %v137 = vunpack.c.l.b16 %v34
    %v138 = vunpack.c.l.b16 %v35
    %v139 = vunpack.c.l.b16 %v36
    %v140 = vunpack.c.l.b16 %v37
    %v141 = vpack.c.b16 %v126, %v125
    %v142 = vpack.c.b16 %v128, %v127
    %v143 = vpack.c.b16 %v130, %v129
    %v144 = vpack.c.b16 %v132, %v131
    %v145 = vpack.c.b16 %v134, %v133
    %v146 = vpack.c.b16 %v136, %v135
    %v147 = vpack.c.b16 %v138, %v137
    %v148 = vpack.c.b16 %v140, %v139
    %157 = vmatprep.subr.bf16.mxu0 0
    %158 = vmatpush1.bf16.msra.mxu0 %v141
    %159 = vmatprep.subr.bf16.mxu0 0
    %160 = vmatpush1.bf16.msra.mxu0 %v142
    %161 = vmatprep.subr.bf16.mxu0 0
    %162 = vmatpush1.bf16.msra.mxu0 %v143
    %163 = vmatprep.subr.bf16.mxu0 0
    %164 = vmatpush1.bf16.msra.mxu0 %v144
    %165 = vmatprep.subr.bf16.mxu0 0
    %166 = vmatpush1.bf16.msra.mxu0 %v145
    %167 = vmatprep.subr.bf16.mxu0 0
    %168 = vmatpush1.bf16.msra.mxu0 %v146
    %169 = vmatprep.subr.bf16.mxu0 0
    %170 = vmatpush1.bf16.msra.mxu0 %v147
    %171 = vmatprep.subr.bf16.mxu0 0
    %172 = vmatpush1.bf16.msra.mxu0 %v148
    %173 = vmatprep.subr.bf16.mxu0 0
    %174 = vmatpush1.bf16.msra.mxu0 0
    %175 = vmatprep.subr.bf16.mxu0 0
    %176 = vmatpush1.bf16.msra.mxu0 0
    %177 = vmatprep.subr.bf16.mxu0 0
    %178 = vmatpush1.bf16.msra.mxu0 0
    %179 = vmatprep.subr.bf16.mxu0 0
    %180 = vmatpush1.bf16.msra.mxu0 0
    %181 = vmatprep.subr.bf16.mxu0 0
    %182 = vmatpush1.bf16.msra.mxu0 0
    %183 = vmatprep.subr.bf16.mxu0 0
    %184 = vmatpush1.bf16.msra.mxu0 0
    %185 = vmatprep.subr.bf16.mxu0 0
    %186 = vmatpush1.bf16.msra.mxu0 0
    %187 = vmatprep.subr.bf16.mxu0 0
    %188 = vmatpush1.bf16.msra.mxu0 0
    %189 = vmatprep.mubr.bf16.mxu0 0
    %190 = vmatmul.mubr.bf16.gmra.mrb[0].mxu0 %v93
    %v191 = vpop.f32.mrb[0].mxu0
    %v192 = vadd.f32 %v59, %v191
    %v193 = vpop.f32.mrb[0].mxu0
    %v194 = vpop.f32.mrb[0].mxu0
    %v195 = vadd.f32 %v59, %v194
    %v196 = vpop.f32.mrb[0].mxu0
    %197 = vmatprep.mubr.bf16.mxu0 0
    %198 = vmatmul.mubr.bf16.gmra.mrb[0].mxu0 %v94
    %v199 = vpop.f32.mrb[0].mxu0
    %v200 = vadd.f32 %v59, %v199
    %v201 = vpop.f32.mrb[0].mxu0
    %v202 = vpop.f32.mrb[0].mxu0
    %v203 = vadd.f32 %v59, %v202
    %v204 = vpop.f32.mrb[0].mxu0
    %205 = vmatprep.mubr.bf16.mxu0 0
    %206 = vmatmul.mubr.bf16.gmra.mrb[0].mxu0 %v95
    %v207 = vpop.f32.mrb[0].mxu0
    %v208 = vadd.f32 %v59, %v207
    %v209 = vpop.f32.mrb[0].mxu0
    %v210 = vpop.f32.mrb[0].mxu0
    %v211 = vadd.f32 %v59, %v210
    %v212 = vpop.f32.mrb[0].mxu0
    %213 = vmatprep.mubr.bf16.mxu0 0
    %214 = vmatmul.mubr.bf16.gmra.mrb[0].mxu0 %v96
    %v215 = vpop.f32.mrb[0].mxu0
    %v216 = vadd.f32 %v59, %v215
    %v217 = vpop.f32.mrb[0].mxu0
    %v218 = vpop.f32.mrb[0].mxu0
    %v219 = vadd.f32 %v59, %v218
    %v220 = vpop.f32.mrb[0].mxu0
    %221 = vmatprep.mubr.bf16.mxu0 0
    %222 = vmatmul.mubr.bf16.gmra.mrb[0].mxu0 %v97
    %v223 = vpop.f32.mrb[0].mxu0
    %v224 = vadd.f32 %v59, %v223
    %v225 = vpop.f32.mrb[0].mxu0
    %v226 = vpop.f32.mrb[0].mxu0
    %v227 = vadd.f32 %v59, %v226
    %v228 = vpop.f32.mrb[0].mxu0
    %229 = vmatprep.mubr.bf16.mxu0 0
    %230 = vmatmul.mubr.bf16.gmra.mrb[0].mxu0 %v98
    %v231 = vpop.f32.mrb[0].mxu0
    %v232 = vadd.f32 %v59, %v231
    %v233 = vpop.f32.mrb[0].mxu0
    %v234 = vpop.f32.mrb[0].mxu0
    %v235 = vadd.f32 %v59, %v234
    %v236 = vpop.f32.mrb[0].mxu0
    %237 = vmatprep.mubr.bf16.mxu0 0
    %238 = vmatmul.mubr.bf16.gmra.mrb[0].mxu0 %v99
    %v239 = vpop.f32.mrb[0].mxu0
    %v240 = vadd.f32 %v59, %v239
    %v241 = vpop.f32.mrb[0].mxu0
    %v242 = vpop.f32.mrb[0].mxu0
    %v243 = vadd.f32 %v59, %v242
    %v244 = vpop.f32.mrb[0].mxu0
    %245 = vmatprep.mubr.bf16.mxu0 0
    %246 = vmatmul.mubr.bf16.gmra.mrb[0].mxu0 %v100
    %v247 = vpop.f32.mrb[0].mxu0
    %v248 = vadd.f32 %v59, %v247
    %v249 = vpop.f32.mrb[0].mxu0
    %v250 = vpop.f32.mrb[0].mxu0
    %v251 = vadd.f32 %v59, %v250
    %v252 = vpop.f32.mrb[0].mxu0
    %253 = vdwg.mxu0
    %v254 = vld [vmem:[%s1] sm:$0xf]
    %v255 = vld [vmem:[%s1 + $0x4] sm:$0xf]
    %v256 = vld [vmem:[%s1 + $0x8] sm:$0xf]
    %v257 = vld [vmem:[%s1 + $0xc] sm:$0xf]
    %v258 = vld [vmem:[%s1 + $0x10] sm:$0xf]
    %v259 = vld [vmem:[%s1 + $0x14] sm:$0xf]
    %v260 = vld [vmem:[%s1 + $0x18] sm:$0xf]
    %v261 = vld [vmem:[%s1 + $0x1c] sm:$0xf]
    %v262 = vld [vmem:[%s1 + $0x20] sm:$0xf]
    %v263 = vld [vmem:[%s1 + $0x24] sm:$0xf]
    %v264 = vld [vmem:[%s1 + $0x28] sm:$0xf]
    %v265 = vld [vmem:[%s1 + $0x2c] sm:$0xf]
    %v266 = vld [vmem:[%s1 + $0x30] sm:$0xf]
    %v267 = vld [vmem:[%s1 + $0x34] sm:$0xf]
    %v268 = vld [vmem:[%s1 + $0x38] sm:$0xf]
    %v269 = vld [vmem:[%s1 + $0x3c] sm:$0xf]
    %v286 = vunpack.c.l.b16 %v254
    %v287 = vunpack.c.l.b16 %v255
    %v288 = vunpack.c.l.b16 %v256
    %v289 = vunpack.c.l.b16 %v257
    %v290 = vunpack.c.l.b16 %v258
    %v291 = vunpack.c.l.b16 %v259
    %v292 = vunpack.c.l.b16 %v260
    %v293 = vunpack.c.l.b16 %v261
    %v294 = vunpack.c.l.b16 %v262
    %v295 = vunpack.c.l.b16 %v263
    %v296 = vunpack.c.l.b16 %v264
    %v297 = vunpack.c.l.b16 %v265
    %v298 = vunpack.c.l.b16 %v266
    %v299 = vunpack.c.l.b16 %v267
    %v300 = vunpack.c.l.b16 %v268
    %v301 = vunpack.c.l.b16 %v269
    %v302 = vpack.c.b16 %v287, %v286
    %v303 = vpack.c.b16 %v289, %v288
    %v304 = vpack.c.b16 %v291, %v290
    %v305 = vpack.c.b16 %v293, %v292
    %v306 = vpack.c.b16 %v295, %v294
    %v307 = vpack.c.b16 %v297, %v296
    %v308 = vpack.c.b16 %v299, %v298
    %v309 = vpack.c.b16 %v301, %v300
    %318 = vmatprep.subr.bf16.mxu0 0
    %319 = vmatpush1.bf16.msra.mxu0 %v141
    %320 = vmatprep.subr.bf16.mxu0 0
    %321 = vmatpush1.bf16.msra.mxu0 %v142
    %322 = vmatprep.subr.bf16.mxu0 0
    %323 = vmatpush1.bf16.msra.mxu0 %v143
    %324 = vmatprep.subr.bf16.mxu0 0
    %325 = vmatpush1.bf16.msra.mxu0 %v144
    %326 = vmatprep.subr.bf16.mxu0 0
    %327 = vmatpush1.bf16.msra.mxu0 %v145
    %328 = vmatprep.subr.bf16.mxu0 0
    %329 = vmatpush1.bf16.msra.mxu0 %v146
    %330 = vmatprep.subr.bf16.mxu0 0
    %331 = vmatpush1.bf16.msra.mxu0 %v147
    %332 = vmatprep.subr.bf16.mxu0 0
    %333 = vmatpush1.bf16.msra.mxu0 %v148
    %334 = vmatprep.subr.bf16.mxu0 0
    %335 = vmatpush1.bf16.msra.mxu0 0
    %336 = vmatprep.subr.bf16.mxu0 0
    %337 = vmatpush1.bf16.msra.mxu0 0
    %338 = vmatprep.subr.bf16.mxu0 0
    %339 = vmatpush1.bf16.msra.mxu0 0
    %340 = vmatprep.subr.bf16.mxu0 0
    %341 = vmatpush1.bf16.msra.mxu0 0
    %342 = vmatprep.subr.bf16.mxu0 0
    %343 = vmatpush1.bf16.msra.mxu0 0
    %344 = vmatprep.subr.bf16.mxu0 0
    %345 = vmatpush1.bf16.msra.mxu0 0
    %346 = vmatprep.subr.bf16.mxu0 0
    %347 = vmatpush1.bf16.msra.mxu0 0
    %348 = vmatprep.subr.bf16.mxu0 0
    %349 = vmatpush1.bf16.msra.mxu0 0
    %350 = vmatprep.mubr.bf16.mxu0 0
    %351 = vmatmul.mubr.bf16.gmra.mrb[0].mxu0 %v302
    %v352 = vpop.f32.mrb[0].mxu0
    %v353 = vadd.f32 %v59, %v352
    %v354 = vpop.f32.mrb[0].mxu0
    %v355 = vpop.f32.mrb[0].mxu0
    %v356 = vadd.f32 %v59, %v355
    %v357 = vpop.f32.mrb[0].mxu0
    %358 = vmatprep.mubr.bf16.mxu0 0
    %359 = vmatmul.mubr.bf16.gmra.mrb[0].mxu0 %v303
    %v360 = vpop.f32.mrb[0].mxu0
    %v361 = vadd.f32 %v59, %v360
    %v362 = vpop.f32.mrb[0].mxu0
    %v363 = vpop.f32.mrb[0].mxu0
    %v364 = vadd.f32 %v59, %v363
    %v365 = vpop.f32.mrb[0].mxu0
    %366 = vmatprep.mubr.bf16.mxu0 0
    %367 = vmatmul.mubr.bf16.gmra.mrb[0].mxu0 %v304
    %v368 = vpop.f32.mrb[0].mxu0
    %v369 = vadd.f32 %v59, %v368
    %v370 = vpop.f32.mrb[0].mxu0
    %v371 = vpop.f32.mrb[0].mxu0
    %v372 = vadd.f32 %v59, %v371
    %v373 = vpop.f32.mrb[0].mxu0
    %374 = vmatprep.mubr.bf16.mxu0 0
    %375 = vmatmul.mubr.bf16.gmra.mrb[0].mxu0 %v305
    %v376 = vpop.f32.mrb[0].mxu0
    %v377 = vadd.f32 %v59, %v376
    %v378 = vpop.f32.mrb[0].mxu0
    %v379 = vpop.f32.mrb[0].mxu0
    %v380 = vadd.f32 %v59, %v379
    %v381 = vpop.f32.mrb[0].mxu0
    %382 = vmatprep.mubr.bf16.mxu0 0
    %383 = vmatmul.mubr.bf16.gmra.mrb[0].mxu0 %v306
    %v384 = vpop.f32.mrb[0].mxu0
    %v385 = vadd.f32 %v59, %v384
    %v386 = vpop.f32.mrb[0].mxu0
    %v387 = vpop.f32.mrb[0].mxu0
    %v388 = vadd.f32 %v59, %v387
    %v389 = vpop.f32.mrb[0].mxu0
    %390 = vmatprep.mubr.bf16.mxu0 0
    %391 = vmatmul.mubr.bf16.gmra.mrb[0].mxu0 %v307
    %v392 = vpop.f32.mrb[0].mxu0
    %v393 = vadd.f32 %v59, %v392
    %v394 = vpop.f32.mrb[0].mxu0
    %v395 = vpop.f32.mrb[0].mxu0
    %v396 = vadd.f32 %v59, %v395
    %v397 = vpop.f32.mrb[0].mxu0
    %398 = vmatprep.mubr.bf16.mxu0 0
    %399 = vmatmul.mubr.bf16.gmra.mrb[0].mxu0 %v308
    %v400 = vpop.f32.mrb[0].mxu0
    %v401 = vadd.f32 %v59, %v400
    %v402 = vpop.f32.mrb[0].mxu0
    %v403 = vpop.f32.mrb[0].mxu0
    %v404 = vadd.f32 %v59, %v403
    %v405 = vpop.f32.mrb[0].mxu0
    %406 = vmatprep.mubr.bf16.mxu0 0
    %407 = vmatmul.mubr.bf16.gmra.mrb[0].mxu0 %v309
    %v408 = vpop.f32.mrb[0].mxu0
    %v409 = vadd.f32 %v59, %v408
    %v410 = vpop.f32.mrb[0].mxu0
    %v411 = vpop.f32.mrb[0].mxu0
    %v412 = vadd.f32 %v59, %v411
    %v413 = vpop.f32.mrb[0].mxu0
    %414 = vdwg.mxu0
    %v415 = vsub.f32 0.0, %v192
    %v416 = vsub.f32 0.0, %v195
    %v417 = vsub.f32 0.0, %v200
    %v418 = vsub.f32 0.0, %v203
    %v419 = vsub.f32 0.0, %v208
    %v420 = vsub.f32 0.0, %v211
    %v421 = vsub.f32 0.0, %v216
    %v422 = vsub.f32 0.0, %v219
    %v423 = vsub.f32 0.0, %v224
    %v424 = vsub.f32 0.0, %v227
    %v425 = vsub.f32 0.0, %v232
    %v426 = vsub.f32 0.0, %v235
    %v427 = vsub.f32 0.0, %v240
    %v428 = vsub.f32 0.0, %v243
    %v429 = vsub.f32 0.0, %v248
    %v430 = vsub.f32 0.0, %v251
    %v431 = vmul.f32 %v415, 1.442695
    %v432 = vpow.pop %v431
    %v433 = vmul.f32 %v416, 1.442695
    %v434 = vpow.pop %v433
    %v435 = vmul.f32 %v417, 1.442695
    %v436 = vpow.pop %v435
    %v437 = vmul.f32 %v418, 1.442695
    %v438 = vpow.pop %v437
    %v439 = vmul.f32 %v419, 1.442695
    %v440 = vpow.pop %v439
    %v441 = vmul.f32 %v420, 1.442695
    %v442 = vpow.pop %v441
    %v443 = vmul.f32 %v421, 1.442695
    %v444 = vpow.pop %v443
    %v445 = vmul.f32 %v422, 1.442695
    %v446 = vpow.pop %v445
    %v447 = vmul.f32 %v423, 1.442695
    %v448 = vpow.pop %v447
    %v449 = vmul.f32 %v424, 1.442695
    %v450 = vpow.pop %v449
    %v451 = vmul.f32 %v425, 1.442695
    %v452 = vpow.pop %v451
    %v453 = vmul.f32 %v426, 1.442695
    %v454 = vpow.pop %v453
    %v455 = vmul.f32 %v427, 1.442695
    %v456 = vpow.pop %v455
    %v457 = vmul.f32 %v428, 1.442695
    %v458 = vpow.pop %v457
    %v459 = vmul.f32 %v429, 1.442695
    %v460 = vpow.pop %v459
    %v461 = vmul.f32 %v430, 1.442695
    %v462 = vpow.pop %v461
    %v463 = vadd.f32 %v432, 1.0
    %v464 = vadd.f32 %v434, 1.0
    %v465 = vadd.f32 %v436, 1.0
    %v466 = vadd.f32 %v438, 1.0
    %v467 = vadd.f32 %v440, 1.0
    %v468 = vadd.f32 %v442, 1.0
    %v469 = vadd.f32 %v444, 1.0
    %v470 = vadd.f32 %v446, 1.0
    %v471 = vadd.f32 %v448, 1.0
    %v472 = vadd.f32 %v450, 1.0
    %v473 = vadd.f32 %v452, 1.0
    %v474 = vadd.f32 %v454, 1.0
    %v475 = vadd.f32 %v456, 1.0
    %v476 = vadd.f32 %v458, 1.0
    %v477 = vadd.f32 %v460, 1.0
    %v478 = vadd.f32 %v462, 1.0
    %v479 = vrcp.pop %v463
    %v480 = vrcp.pop %v464
    %v481 = vrcp.pop %v465
    %v482 = vrcp.pop %v466
    %v483 = vrcp.pop %v467
    %v484 = vrcp.pop %v468
    %v485 = vrcp.pop %v469
    %v486 = vrcp.pop %v470
    %v487 = vrcp.pop %v471
    %v488 = vrcp.pop %v472
    %v489 = vrcp.pop %v473
    %v490 = vrcp.pop %v474
    %v491 = vrcp.pop %v475
    %v492 = vrcp.pop %v476
    %v493 = vrcp.pop %v477
    %v494 = vrcp.pop %v478
    %v495 = vmul.f32 %v192, %v479
    %v496 = vmul.f32 %v195, %v480
    %v497 = vmul.f32 %v200, %v481
    %v498 = vmul.f32 %v203, %v482
    %v499 = vmul.f32 %v208, %v483
    %v500 = vmul.f32 %v211, %v484
    %v501 = vmul.f32 %v216, %v485
    %v502 = vmul.f32 %v219, %v486
    %v503 = vmul.f32 %v224, %v487
    %v504 = vmul.f32 %v227, %v488
    %v505 = vmul.f32 %v232, %v489
    %v506 = vmul.f32 %v235, %v490
    %v507 = vmul.f32 %v240, %v491
    %v508 = vmul.f32 %v243, %v492
    %v509 = vmul.f32 %v248, %v493
    %v510 = vmul.f32 %v251, %v494
    %v511 = vsub.f32 0.0, %v353
    %v512 = vsub.f32 0.0, %v356
    %v513 = vsub.f32 0.0, %v361
    %v514 = vsub.f32 0.0, %v364
    %v515 = vsub.f32 0.0, %v369
    %v516 = vsub.f32 0.0, %v372
    %v517 = vsub.f32 0.0, %v377
    %v518 = vsub.f32 0.0, %v380
    %v519 = vsub.f32 0.0, %v385
    %v520 = vsub.f32 0.0, %v388
    %v521 = vsub.f32 0.0, %v393
    %v522 = vsub.f32 0.0, %v396
    %v523 = vsub.f32 0.0, %v401
    %v524 = vsub.f32 0.0, %v404
    %v525 = vsub.f32 0.0, %v409
    %v526 = vsub.f32 0.0, %v412
    %v527 = vmul.f32 %v511, 1.442695
    %v528 = vpow.pop %v527
    %v529 = vmul.f32 %v512, 1.442695
    %v530 = vpow.pop %v529
    %v531 = vmul.f32 %v513, 1.442695
    %v532 = vpow.pop %v531
    %v533 = vmul.f32 %v514, 1.442695
    %v534 = vpow.pop %v533
    %v535 = vmul.f32 %v515, 1.442695
    %v536 = vpow.pop %v535
    %v537 = vmul.f32 %v516, 1.442695
    %v538 = vpow.pop %v537
    %v539 = vmul.f32 %v517, 1.442695
    %v540 = vpow.pop %v539
    %v541 = vmul.f32 %v518, 1.442695
    %v542 = vpow.pop %v541
    %v543 = vmul.f32 %v519, 1.442695
    %v544 = vpow.pop %v543
    %v545 = vmul.f32 %v520, 1.442695
    %v546 = vpow.pop %v545
    %v547 = vmul.f32 %v521, 1.442695
    %v548 = vpow.pop %v547
    %v549 = vmul.f32 %v522, 1.442695
    %v550 = vpow.pop %v549
    %v551 = vmul.f32 %v523, 1.442695
    %v552 = vpow.pop %v551
    %v553 = vmul.f32 %v524, 1.442695
    %v554 = vpow.pop %v553
    %v555 = vmul.f32 %v525, 1.442695
    %v556 = vpow.pop %v555
    %v557 = vmul.f32 %v526, 1.442695
    %v558 = vpow.pop %v557
    %v559 = vadd.f32 %v528, 1.0
    %v560 = vadd.f32 %v530, 1.0
    %v561 = vadd.f32 %v532, 1.0
    %v562 = vadd.f32 %v534, 1.0
    %v563 = vadd.f32 %v536, 1.0
    %v564 = vadd.f32 %v538, 1.0
    %v565 = vadd.f32 %v540, 1.0
    %v566 = vadd.f32 %v542, 1.0
    %v567 = vadd.f32 %v544, 1.0
    %v568 = vadd.f32 %v546, 1.0
    %v569 = vadd.f32 %v548, 1.0
    %v570 = vadd.f32 %v550, 1.0
    %v571 = vadd.f32 %v552, 1.0
    %v572 = vadd.f32 %v554, 1.0
    %v573 = vadd.f32 %v556, 1.0
    %v574 = vadd.f32 %v558, 1.0
    %v575 = vrcp.pop %v559
    %v576 = vrcp.pop %v560
    %v577 = vrcp.pop %v561
    %v578 = vrcp.pop %v562
    %v579 = vrcp.pop %v563
    %v580 = vrcp.pop %v564
    %v581 = vrcp.pop %v565
    %v582 = vrcp.pop %v566
    %v583 = vrcp.pop %v567
    %v584 = vrcp.pop %v568
    %v585 = vrcp.pop %v569
    %v586 = vrcp.pop %v570
    %v587 = vrcp.pop %v571
    %v588 = vrcp.pop %v572
    %v589 = vrcp.pop %v573
    %v590 = vrcp.pop %v574
    %v591 = vmul.f32 %v353, %v575
    %v592 = vmul.f32 %v356, %v576
    %v593 = vmul.f32 %v361, %v577
    %v594 = vmul.f32 %v364, %v578
    %v595 = vmul.f32 %v369, %v579
    %v596 = vmul.f32 %v372, %v580
    %v597 = vmul.f32 %v377, %v581
    %v598 = vmul.f32 %v380, %v582
    %v599 = vmul.f32 %v385, %v583
    %v600 = vmul.f32 %v388, %v584
    %v601 = vmul.f32 %v393, %v585
    %v602 = vmul.f32 %v396, %v586
    %v603 = vmul.f32 %v401, %v587
    %v604 = vmul.f32 %v404, %v588
    %v605 = vmul.f32 %v409, %v589
    %v606 = vmul.f32 %v412, %v590
    %v607 = vpack.c.bf16 %v496, %v495
    %v608 = vpack.c.bf16 %v498, %v497
    %v609 = vpack.c.bf16 %v500, %v499
    %v610 = vpack.c.bf16 %v502, %v501
    %v611 = vpack.c.bf16 %v504, %v503
    %v612 = vpack.c.bf16 %v506, %v505
    %v613 = vpack.c.bf16 %v508, %v507
    %v614 = vpack.c.bf16 %v510, %v509
    %v623 = vunpack.c.l.b16 %v607
    %v624 = vunpack.c.h.b16 %v607
    %v625 = vunpack.c.l.b16 %v608
    %v626 = vunpack.c.h.b16 %v608
    %v627 = vunpack.c.l.b16 %v609
    %v628 = vunpack.c.h.b16 %v609
    %v629 = vunpack.c.l.b16 %v610
    %v630 = vunpack.c.h.b16 %v610
    %v631 = vunpack.c.l.b16 %v611
    %v632 = vunpack.c.h.b16 %v611
    %v633 = vunpack.c.l.b16 %v612
    %v634 = vunpack.c.h.b16 %v612
    %v635 = vunpack.c.l.b16 %v613
    %v636 = vunpack.c.h.b16 %v613
    %v637 = vunpack.c.l.b16 %v614
    %v638 = vunpack.c.h.b16 %v614
    %v639 = vpack.c.b16 %v623, %v623
    %v640 = vpack.c.b16 %v624, %v624
    %v641 = vpack.c.b16 %v625, %v625
    %v642 = vpack.c.b16 %v626, %v626
    %v643 = vpack.c.b16 %v627, %v627
    %v644 = vpack.c.b16 %v628, %v628
    %v645 = vpack.c.b16 %v629, %v629
    %v646 = vpack.c.b16 %v630, %v630
    %v647 = vpack.c.b16 %v631, %v631
    %v648 = vpack.c.b16 %v632, %v632
    %v649 = vpack.c.b16 %v633, %v633
    %v650 = vpack.c.b16 %v634, %v634
    %v651 = vpack.c.b16 %v635, %v635
    %v652 = vpack.c.b16 %v636, %v636
    %v653 = vpack.c.b16 %v637, %v637
    %v654 = vpack.c.b16 %v638, %v638
    %671 = vst [vmem:[%s4] sm:$0xf] %v639
    %672 = vst [vmem:[%s4 + $0x4] sm:$0xf] %v640
    %673 = vst [vmem:[%s4 + $0x8] sm:$0xf] %v641
    %674 = vst [vmem:[%s4 + $0xc] sm:$0xf] %v642
    %675 = vst [vmem:[%s4 + $0x10] sm:$0xf] %v643
    %676 = vst [vmem:[%s4 + $0x14] sm:$0xf] %v644
    %677 = vst [vmem:[%s4 + $0x18] sm:$0xf] %v645
    %678 = vst [vmem:[%s4 + $0x1c] sm:$0xf] %v646
    %679 = vst [vmem:[%s4 + $0x20] sm:$0xf] %v647
    %680 = vst [vmem:[%s4 + $0x24] sm:$0xf] %v648
    %681 = vst [vmem:[%s4 + $0x28] sm:$0xf] %v649
    %682 = vst [vmem:[%s4 + $0x2c] sm:$0xf] %v650
    %683 = vst [vmem:[%s4 + $0x30] sm:$0xf] %v651
    %684 = vst [vmem:[%s4 + $0x34] sm:$0xf] %v652
    %685 = vst [vmem:[%s4 + $0x38] sm:$0xf] %v653
    %686 = vst [vmem:[%s4 + $0x3c] sm:$0xf] %v654
    %v687 = vpack.c.bf16 %v592, %v591
    %v688 = vpack.c.bf16 %v594, %v593
    %v689 = vpack.c.bf16 %v596, %v595
    %v690 = vpack.c.bf16 %v598, %v597
    %v691 = vpack.c.bf16 %v600, %v599
    %v692 = vpack.c.bf16 %v602, %v601
    %v693 = vpack.c.bf16 %v604, %v603
    %v694 = vpack.c.bf16 %v606, %v605
    %v703 = vunpack.c.l.b16 %v687
    %v704 = vunpack.c.h.b16 %v687
    %v705 = vunpack.c.l.b16 %v688
    %v706 = vunpack.c.h.b16 %v688
    %v707 = vunpack.c.l.b16 %v689
    %v708 = vunpack.c.h.b16 %v689
    %v709 = vunpack.c.l.b16 %v690
    %v710 = vunpack.c.h.b16 %v690
    %v711 = vunpack.c.l.b16 %v691
    %v712 = vunpack.c.h.b16 %v691
    %v713 = vunpack.c.l.b16 %v692
    %v714 = vunpack.c.h.b16 %v692
    %v715 = vunpack.c.l.b16 %v693
    %v716 = vunpack.c.h.b16 %v693
    %v717 = vunpack.c.l.b16 %v694
    %v718 = vunpack.c.h.b16 %v694
    %v719 = vpack.c.b16 %v703, %v703
    %v720 = vpack.c.b16 %v704, %v704
    %v721 = vpack.c.b16 %v705, %v705
    %v722 = vpack.c.b16 %v706, %v706
    %v723 = vpack.c.b16 %v707, %v707
    %v724 = vpack.c.b16 %v708, %v708
    %v725 = vpack.c.b16 %v709, %v709
    %v726 = vpack.c.b16 %v710, %v710
    %v727 = vpack.c.b16 %v711, %v711
    %v728 = vpack.c.b16 %v712, %v712
    %v729 = vpack.c.b16 %v713, %v713
    %v730 = vpack.c.b16 %v714, %v714
    %v731 = vpack.c.b16 %v715, %v715
    %v732 = vpack.c.b16 %v716, %v716
    %v733 = vpack.c.b16 %v717, %v717
    %v734 = vpack.c.b16 %v718, %v718
    %751 = vst [vmem:[%s5] sm:$0xf] %v719
    %752 = vst [vmem:[%s5 + $0x4] sm:$0xf] %v720
    %753 = vst [vmem:[%s5 + $0x8] sm:$0xf] %v721
    %754 = vst [vmem:[%s5 + $0xc] sm:$0xf] %v722
    %755 = vst [vmem:[%s5 + $0x10] sm:$0xf] %v723
    %756 = vst [vmem:[%s5 + $0x14] sm:$0xf] %v724
    %757 = vst [vmem:[%s5 + $0x18] sm:$0xf] %v725
    %758 = vst [vmem:[%s5 + $0x1c] sm:$0xf] %v726
    %759 = vst [vmem:[%s5 + $0x20] sm:$0xf] %v727
    %760 = vst [vmem:[%s5 + $0x24] sm:$0xf] %v728
    %761 = vst [vmem:[%s5 + $0x28] sm:$0xf] %v729
    %762 = vst [vmem:[%s5 + $0x2c] sm:$0xf] %v730
    %763 = vst [vmem:[%s5 + $0x30] sm:$0xf] %v731
    %764 = vst [vmem:[%s5 + $0x34] sm:$0xf] %v732
    %765 = vst [vmem:[%s5 + $0x38] sm:$0xf] %v733
    %766 = vst [vmem:[%s5 + $0x3c] sm:$0xf] %v734
    %v767 = vsub.f32 %v495, %v591
    %v768 = vsub.f32 %v496, %v592
    %v769 = vsub.f32 %v497, %v593
    %v770 = vsub.f32 %v498, %v594
    %v771 = vsub.f32 %v499, %v595
    %v772 = vsub.f32 %v500, %v596
    %v773 = vsub.f32 %v501, %v597
    %v774 = vsub.f32 %v502, %v598
    %v775 = vsub.f32 %v503, %v599
    %v776 = vsub.f32 %v504, %v600
    %v777 = vsub.f32 %v505, %v601
    %v778 = vsub.f32 %v506, %v602
    %v779 = vsub.f32 %v507, %v603
    %v780 = vsub.f32 %v508, %v604
    %v781 = vsub.f32 %v509, %v605
    %v782 = vsub.f32 %v510, %v606
    %v783 = vand.u32 2147483647, %v767
    %v784 = vand.u32 2147483647, %v768
    %v785 = vand.u32 2147483647, %v769
    %v786 = vand.u32 2147483647, %v770
    %v787 = vand.u32 2147483647, %v771
    %v788 = vand.u32 2147483647, %v772
    %v789 = vand.u32 2147483647, %v773
    %v790 = vand.u32 2147483647, %v774
    %v791 = vand.u32 2147483647, %v775
    %v792 = vand.u32 2147483647, %v776
    %v793 = vand.u32 2147483647, %v777
    %v794 = vand.u32 2147483647, %v778
    %v795 = vand.u32 2147483647, %v779
    %v796 = vand.u32 2147483647, %v780
    %v797 = vand.u32 2147483647, %v781
    %v798 = vand.u32 2147483647, %v782
    %v799 = vadd.f32 %v783, %v784
    %v800 = vadd.f32 %v799, %v785
    %v801 = vadd.f32 %v800, %v786
    %v802 = vadd.f32 %v801, %v787
    %v803 = vadd.f32 %v802, %v788
    %v804 = vadd.f32 %v803, %v789
    %v805 = vadd.f32 %v804, %v790
    %v806 = vadd.f32 %v805, %v791
    %v807 = vadd.f32 %v806, %v792
    %v808 = vadd.f32 %v807, %v793
    %v809 = vadd.f32 %v808, %v794
    %v810 = vadd.f32 %v809, %v795
    %v811 = vadd.f32 %v810, %v796
    %v812 = vadd.f32 %v811, %v797
    %v813 = vadd.f32 %v812, %v798
    %814 = vadd.xlane.f32.xlu0 %v813
    %v815 = vpop.xlane.xlu0 %814
    %v816 = vrot.slane %v815, 4
    %v817 = vadd.f32 %v815, %v816
    %v818 = vrot.slane %v817, 2
    %v819 = vadd.f32 %v817, %v818
    %v820 = vrot.slane %v819, 1
    %v821 = vadd.f32 %v819, %v820
    %s822 = vtos %v821
    %s823 = scalar_lea.smem [#allocation2], 0
    %824 = sst [smem:[%s823]] %s822
    // Predicated region
    $region18: #{effi_perceptual_loss.2} parent=1 // pred_check
      _
    $region19: #{effi_perceptual_loss.2} parent=1 // pred_check_branch
      %826 = sbr.rel (0) target = $region21
    $region20: #{effi_perceptual_loss.2} parent=1 // pred_region
      _
    $region21: #{effi_perceptual_loss.2} parent=1 // pred_fallthru
      _
    // Predicated region
    $region22: #{effi_perceptual_loss.2} parent=1 // pred_check
      _
    $region23: #{effi_perceptual_loss.2} parent=1 // pred_check_branch
      %828 = sbr.rel (0) target = $region25
    $region24: #{effi_perceptual_loss.2} parent=1 // pred_region
      _
    $region25: #{effi_perceptual_loss.2} parent=1 // pred_fallthru
      _
    // Predicated region
    $region26: #{effi_perceptual_loss.2} parent=1 // pred_check
      _
    $region27: #{effi_perceptual_loss.2} parent=1 // pred_check_branch
      %830 = sbr.rel (0) target = $region29
    $region28: #{effi_perceptual_loss.2} parent=1 // pred_region
      %s832 = ssub.s32 16, 16
      %833 = vsyncadd [#allocation3], %s832
      %836 = dma.smem_to_hbm [#allocation2], 16, %s6, [#allocation3]
    $region29: #{effi_perceptual_loss.2} parent=1 // pred_fallthru
      _
    // Predicated region
    $region30: #{effi_perceptual_loss.2} parent=1 // pred_check
      _
    $region31: #{effi_perceptual_loss.2} parent=1 // pred_check_branch
      %838 = sbr.rel (0) target = $region33
    $region32: #{effi_perceptual_loss.2} parent=1 // pred_region
      _
    $region33: #{effi_perceptual_loss.2} parent=1 // pred_fallthru
      _
    // Predicated region
    $region34: #{effi_perceptual_loss.2} parent=1 // pred_check
      _
    $region35: #{effi_perceptual_loss.2} parent=1 // pred_check_branch
      %840 = sbr.rel (0) target = $region37
    $region36: #{effi_perceptual_loss.2} parent=1 // pred_region
      _
    $region37: #{effi_perceptual_loss.2} parent=1 // pred_fallthru
      _
    // Predicated region
    $region38: #{effi_perceptual_loss.2} parent=1 // pred_check
      _
    $region39: #{effi_perceptual_loss.2} parent=1 // pred_check_branch
      %842 = sbr.rel (0) target = $region41
    $region40: #{effi_perceptual_loss.2} parent=1 // pred_region
      %843 = dma.done [#allocation3], 16
    $region41: #{effi_perceptual_loss.2} parent=1 // pred_fallthru
      _
    %844 = sfence
    %845 = vsyncpa [#allocation3], 1

// kernel: effi_perceptual_loss.3
$region0: #{effi_perceptual_loss.3}
  #allocation0 [shape = 'u32[]', space=smem, size = 0x4, offset = 0x4, fixed_abs, tag = 'smem constant byte address 0x4 - core index']
  #allocation1 [shape = 'u32[144,128]{1,0:T(1,128)}', space=vmem, size = 0x12000, scoped, tag = 'internal scratch']
  %s0 = inlined_call_operand.vmem [shape: bf16[32,384], index: 0, kind: input, shape index: {}]
  %s1 = inlined_call_operand.vmem [shape: bf16[32,384], index: 1, kind: input, shape index: {}]
  %s2 = inlined_call_operand.vmem [shape: bf16[384,128], index: 2, kind: input, shape index: {}]
  %s3 = inlined_call_operand.vmem [shape: f32[1,128], index: 3, kind: input, shape index: {}]
  %s4 = inlined_call_operand.hbm [shape: f32[1,1], index: 4, kind: output, shape index: {}]
  %s5 = sld [smem:[#allocation0]]
  $region26: #{effi_perceptual_loss.3} parent=0
    _
  %s7 = ssub.s32 1, %s5
  %s8 = scalar_select 0, %s7, %s5
  $region1: #{effi_perceptual_loss.3} parent=0
    #allocation2 [shape = 'u8[512]{0}', space=smem, size = 0x200, scoped, tag = 'output window, operand 0, single buffered']
    #allocation3 [shape = 's32[1]{0}', space=sflag, size = 0x4, scoped, tag = 'scoped memory for effi_perceptual_loss.3']
    %9 = vsyncpa [#allocation3], 0
    // Predicated region
    $region2: #{effi_perceptual_loss.3} parent=1 // pred_check
      _
    $region3: #{effi_perceptual_loss.3} parent=1 // pred_check_branch
      %11 = sbr.rel (0) target = $region5
    $region4: #{effi_perceptual_loss.3} parent=1 // pred_region
      _
    $region5: #{effi_perceptual_loss.3} parent=1 // pred_fallthru
      _
    // Predicated region
    $region6: #{effi_perceptual_loss.3} parent=1 // pred_check
      _
    $region7: #{effi_perceptual_loss.3} parent=1 // pred_check_branch
      %13 = sbr.rel (0) target = $region9
    $region8: #{effi_perceptual_loss.3} parent=1 // pred_region
      _
    $region9: #{effi_perceptual_loss.3} parent=1 // pred_fallthru
      _
    // Predicated region
    $region10: #{effi_perceptual_loss.3} parent=1 // pred_check
      _
    $region11: #{effi_perceptual_loss.3} parent=1 // pred_check_branch
      %15 = sbr.rel (0) target = $region13
    $region12: #{effi_perceptual_loss.3} parent=1 // pred_region
      _
    $region13: #{effi_perceptual_loss.3} parent=1 // pred_fallthru
      _
    // Predicated region
    $region14: #{effi_perceptual_loss.3} parent=1 // pred_check
      _
    $region15: #{effi_perceptual_loss.3} parent=1 // pred_check_branch
      %17 = sbr.rel (0) target = $region17
    $region16: #{effi_perceptual_loss.3} parent=1 // pred_region
      _
    $region17: #{effi_perceptual_loss.3} parent=1 // pred_fallthru
      _
    %v19 = vld [vmem:[%s2] sm:$0xf]
    %v20 = vld [vmem:[%s2 + $0x4] sm:$0xf]
    %v21 = vld [vmem:[%s2 + $0x8] sm:$0xf]
    %v22 = vld [vmem:[%s2 + $0xc] sm:$0xf]
    %v23 = vld [vmem:[%s2 + $0x10] sm:$0xf]
    %v24 = vld [vmem:[%s2 + $0x14] sm:$0xf]
    %v25 = vld [vmem:[%s2 + $0x18] sm:$0xf]
    %v26 = vld [vmem:[%s2 + $0x1c] sm:$0xf]
    %v27 = vld [vmem:[%s2 + $0x20] sm:$0xf]
    %v28 = vld [vmem:[%s2 + $0x24] sm:$0xf]
    %v29 = vld [vmem:[%s2 + $0x28] sm:$0xf]
    %v30 = vld [vmem:[%s2 + $0x2c] sm:$0xf]
    %v31 = vld [vmem:[%s2 + $0x30] sm:$0xf]
    %v32 = vld [vmem:[%s2 + $0x34] sm:$0xf]
    %v33 = vld [vmem:[%s2 + $0x38] sm:$0xf]
    %v34 = vld [vmem:[%s2 + $0x3c] sm:$0xf]
    %v35 = vld [vmem:[%s2 + $0x40] sm:$0xf]
    %v36 = vld [vmem:[%s2 + $0x44] sm:$0xf]
    %v37 = vld [vmem:[%s2 + $0x48] sm:$0xf]
    %v38 = vld [vmem:[%s2 + $0x4c] sm:$0xf]
    %v39 = vld [vmem:[%s2 + $0x50] sm:$0xf]
    %v40 = vld [vmem:[%s2 + $0x54] sm:$0xf]
    %v41 = vld [vmem:[%s2 + $0x58] sm:$0xf]
    %v42 = vld [vmem:[%s2 + $0x5c] sm:$0xf]
    %v43 = vld [vmem:[%s2 + $0x60] sm:$0xf]
    %v44 = vld [vmem:[%s2 + $0x64] sm:$0xf]
    %v45 = vld [vmem:[%s2 + $0x68] sm:$0xf]
    %v46 = vld [vmem:[%s2 + $0x6c] sm:$0xf]
    %v47 = vld [vmem:[%s2 + $0x70] sm:$0xf]
    %v48 = vld [vmem:[%s2 + $0x74] sm:$0xf]
    %v49 = vld [vmem:[%s2 + $0x78] sm:$0xf]
    %v50 = vld [vmem:[%s2 + $0x7c] sm:$0xf]
    %v51 = vld [vmem:[%s2 + $0x80] sm:$0xf]
    %v52 = vld [vmem:[%s2 + $0x84] sm:$0xf]
    %v53 = vld [vmem:[%s2 + $0x88] sm:$0xf]
    %v54 = vld [vmem:[%s2 + $0x8c] sm:$0xf]
    %v55 = vld [vmem:[%s2 + $0x90] sm:$0xf]
    %v56 = vld [vmem:[%s2 + $0x94] sm:$0xf]
    %v57 = vld [vmem:[%s2 + $0x98] sm:$0xf]
    %v58 = vld [vmem:[%s2 + $0x9c] sm:$0xf]
    %v59 = vld [vmem:[%s2 + $0xa0] sm:$0xf]
    %v60 = vld [vmem:[%s2 + $0xa4] sm:$0xf]
    %v61 = vld [vmem:[%s2 + $0xa8] sm:$0xf]
    %v62 = vld [vmem:[%s2 + $0xac] sm:$0xf]
    %v63 = vld [vmem:[%s2 + $0xb0] sm:$0xf]
    %v64 = vld [vmem:[%s2 + $0xb4] sm:$0xf]
    %v65 = vld [vmem:[%s2 + $0xb8] sm:$0xf]
    %v66 = vld [vmem:[%s2 + $0xbc] sm:$0xf]
    %v67 = vld [vmem:[%s3] sm:$0x1]
    %v68 = vld [vmem:[%s0] sm:$0xff]
    %v69 = vld [vmem:[%s0 + $0x8] sm:$0xf]
    %v70 = vld [vmem:[%s0 + $0xc] sm:$0xff]
    %v71 = vld [vmem:[%s0 + $0x14] sm:$0xf]
    %v72 = vld [vmem:[%s0 + $0x18] sm:$0xff]
    %v73 = vld [vmem:[%s0 + $0x20] sm:$0xf]
    %v74 = vld [vmem:[%s0 + $0x24] sm:$0xff]
    %v75 = vld [vmem:[%s0 + $0x2c] sm:$0xf]
    %v77 = vlaneseq
    %v78 = vshrl.u32 %v77, 7
    %v79 = vsub.s32 0, %v78
    %v80 = vrot.slane %v67, %v79
    %v90 = vunpack.c.l.b16 %v68
    %v91 = vunpack.c.h.b16 %v68
    %v92 = vunpack.c.l.b16 %v69
    %v93 = vunpack.c.l.b16 %v70
    %v94 = vunpack.c.h.b16 %v70
    %v95 = vunpack.c.l.b16 %v71
    %v96 = vunpack.c.l.b16 %v72
    %v97 = vunpack.c.h.b16 %v72
    %v98 = vunpack.c.l.b16 %v73
    %v99 = vunpack.c.l.b16 %v74
    %v100 = vunpack.c.h.b16 %v74
    %v101 = vunpack.c.l.b16 %v75
    %v102 = vpack.c.b16 %v93, %v90
    %v103 = vpack.c.b16 %v94, %v91
    %v104 = vpack.c.b16 %v95, %v92
    %v105 = vpack.c.b16 %v99, %v96
    %v106 = vpack.c.b16 %v100, %v97
    %v107 = vpack.c.b16 %v101, %v98
    %v162 = vunpack.c.l.b16 %v19
    %v163 = vunpack.c.l.b16 %v20
    %v164 = vunpack.c.l.b16 %v21
    %v165 = vunpack.c.l.b16 %v22
    %v166 = vunpack.c.l.b16 %v23
    %v167 = vunpack.c.l.b16 %v24
    %v168 = vunpack.c.l.b16 %v25
    %v169 = vunpack.c.l.b16 %v26
    %v170 = vunpack.c.l.b16 %v27
    %v171 = vunpack.c.l.b16 %v28
    %v172 = vunpack.c.l.b16 %v29
    %v173 = vunpack.c.l.b16 %v30
    %v174 = vunpack.c.l.b16 %v31
    %v175 = vunpack.c.l.b16 %v32
    %v176 = vunpack.c.l.b16 %v33
    %v177 = vunpack.c.l.b16 %v34
    %v178 = vunpack.c.l.b16 %v35
    %v179 = vunpack.c.l.b16 %v36
    %v180 = vunpack.c.l.b16 %v37
    %v181 = vunpack.c.l.b16 %v38
    %v182 = vunpack.c.l.b16 %v39
    %v183 = vunpack.c.l.b16 %v40
    %v184 = vunpack.c.l.b16 %v41
    %v185 = vunpack.c.l.b16 %v42
    %v186 = vunpack.c.l.b16 %v43
    %v187 = vunpack.c.l.b16 %v44
    %v188 = vunpack.c.l.b16 %v45
    %v189 = vunpack.c.l.b16 %v46
    %v190 = vunpack.c.l.b16 %v47
    %v191 = vunpack.c.l.b16 %v48
    %v192 = vunpack.c.l.b16 %v49
    %v193 = vunpack.c.l.b16 %v50
    %v194 = vunpack.c.l.b16 %v51
    %v195 = vunpack.c.l.b16 %v52
    %v196 = vunpack.c.l.b16 %v53
    %v197 = vunpack.c.l.b16 %v54
    %v198 = vunpack.c.l.b16 %v55
    %v199 = vunpack.c.l.b16 %v56
    %v200 = vunpack.c.l.b16 %v57
    %v201 = vunpack.c.l.b16 %v58
    %v202 = vunpack.c.l.b16 %v59
    %v203 = vunpack.c.l.b16 %v60
    %v204 = vunpack.c.l.b16 %v61
    %v205 = vunpack.c.l.b16 %v62
    %v206 = vunpack.c.l.b16 %v63
    %v207 = vunpack.c.l.b16 %v64
    %v208 = vunpack.c.l.b16 %v65
    %v209 = vunpack.c.l.b16 %v66
    %v210 = vpack.c.b16 %v163, %v162
    %v211 = vpack.c.b16 %v165, %v164
    %v212 = vpack.c.b16 %v167, %v166
    %v213 = vpack.c.b16 %v169, %v168
    %v214 = vpack.c.b16 %v171, %v170
    %v215 = vpack.c.b16 %v173, %v172
    %v216 = vpack.c.b16 %v175, %v174
    %v217 = vpack.c.b16 %v177, %v176
    %v218 = vpack.c.b16 %v179, %v178
    %v219 = vpack.c.b16 %v181, %v180
    %v220 = vpack.c.b16 %v183, %v182
    %v221 = vpack.c.b16 %v185, %v184
    %v222 = vpack.c.b16 %v187, %v186
    %v223 = vpack.c.b16 %v189, %v188
    %v224 = vpack.c.b16 %v191, %v190
    %v225 = vpack.c.b16 %v193, %v192
    %v226 = vpack.c.b16 %v195, %v194
    %v227 = vpack.c.b16 %v197, %v196
    %v228 = vpack.c.b16 %v199, %v198
    %v229 = vpack.c.b16 %v201, %v200
    %v230 = vpack.c.b16 %v203, %v202
    %v231 = vpack.c.b16 %v205, %v204
    %v232 = vpack.c.b16 %v207, %v206
    %v233 = vpack.c.b16 %v209, %v208
    %258 = vmatprep.subr.bf16.mxu0 0
    %259 = vmatpush1.bf16.msra.mxu0 %v210
    %260 = vmatprep.subr.bf16.mxu0 0
    %261 = vmatpush1.bf16.msra.mxu0 %v211
    %262 = vmatprep.subr.bf16.mxu0 0
    %263 = vmatpush1.bf16.msra.mxu0 %v212
    %264 = vmatprep.subr.bf16.mxu0 0
    %265 = vmatpush1.bf16.msra.mxu0 %v213
    %266 = vmatprep.subr.bf16.mxu0 0
    %267 = vmatpush1.bf16.msra.mxu0 %v214
    %268 = vmatprep.subr.bf16.mxu0 0
    %269 = vmatpush1.bf16.msra.mxu0 %v215
    %270 = vmatprep.subr.bf16.mxu0 0
    %271 = vmatpush1.bf16.msra.mxu0 %v216
    %272 = vmatprep.subr.bf16.mxu0 0
    %273 = vmatpush1.bf16.msra.mxu0 %v217
    %274 = vmatprep.subr.bf16.mxu0 0
    %275 = vmatpush1.bf16.msra.mxu0 %v218
    %276 = vmatprep.subr.bf16.mxu0 0
    %277 = vmatpush1.bf16.msra.mxu0 %v219
    %278 = vmatprep.subr.bf16.mxu0 0
    %279 = vmatpush1.bf16.msra.mxu0 %v220
    %280 = vmatprep.subr.bf16.mxu0 0
    %281 = vmatpush1.bf16.msra.mxu0 %v221
    %282 = vmatprep.subr.bf16.mxu0 0
    %283 = vmatpush1.bf16.msra.mxu0 %v222
    %284 = vmatprep.subr.bf16.mxu0 0
    %285 = vmatpush1.bf16.msra.mxu0 %v223
    %286 = vmatprep.subr.bf16.mxu0 0
    %287 = vmatpush1.bf16.msra.mxu0 %v224
    %288 = vmatprep.subr.bf16.mxu0 0
    %289 = vmatpush1.bf16.msra.mxu0 %v225
    %290 = vmatprep.mubr.bf16.mxu0 %v103
    %291 = vmatmul.mubr.bf16.gmra.mrb[0].mxu0 %v102
    %v292 = vpop.f32.mrb[0].mxu0
    %v293 = vadd.f32 %v80, %v292
    %v294 = vpop.f32.mrb[0].mxu0
    %v295 = vpop.f32.mrb[0].mxu0
    %v296 = vadd.f32 %v80, %v295
    %v297 = vpop.f32.mrb[0].mxu0
    %298 = vmatprep.mubr.bf16.mxu0 %v106
    %299 = vmatmul.mubr.bf16.gmra.mrb[0].mxu0 %v105
    %v300 = vpop.f32.mrb[0].mxu0
    %v301 = vadd.f32 %v80, %v300
    %v302 = vpop.f32.mrb[0].mxu0
    %v303 = vpop.f32.mrb[0].mxu0
    %v304 = vadd.f32 %v80, %v303
    %v305 = vpop.f32.mrb[0].mxu0
    %306 = vdwg.mxu0
    %307 = vmatprep.subr.bf16.mxu0 0
    %308 = vmatpush1.bf16.msra.mxu0 %v226
    %309 = vmatprep.subr.bf16.mxu0 0
    %310 = vmatpush1.bf16.msra.mxu0 %v227
    %311 = vmatprep.subr.bf16.mxu0 0
    %312 = vmatpush1.bf16.msra.mxu0 %v228
    %313 = vmatprep.subr.bf16.mxu0 0
    %314 = vmatpush1.bf16.msra.mxu0 %v229
    %315 = vmatprep.subr.bf16.mxu0 0
    %316 = vmatpush1.bf16.msra.mxu0 %v230
    %317 = vmatprep.subr.bf16.mxu0 0
    %318 = vmatpush1.bf16.msra.mxu0 %v231
    %319 = vmatprep.subr.bf16.mxu0 0
    %320 = vmatpush1.bf16.msra.mxu0 %v232
    %321 = vmatprep.subr.bf16.mxu0 0
    %322 = vmatpush1.bf16.msra.mxu0 %v233
    %323 = vmatprep.subr.bf16.mxu0 0
    %324 = vmatpush1.bf16.msra.mxu0 0
    %325 = vmatprep.subr.bf16.mxu0 0
    %326 = vmatpush1.bf16.msra.mxu0 0
    %327 = vmatprep.subr.bf16.mxu0 0
    %328 = vmatpush1.bf16.msra.mxu0 0
    %329 = vmatprep.subr.bf16.mxu0 0
    %330 = vmatpush1.bf16.msra.mxu0 0
    %331 = vmatprep.subr.bf16.mxu0 0
    %332 = vmatpush1.bf16.msra.mxu0 0
    %333 = vmatprep.subr.bf16.mxu0 0
    %334 = vmatpush1.bf16.msra.mxu0 0
    %335 = vmatprep.subr.bf16.mxu0 0
    %336 = vmatpush1.bf16.msra.mxu0 0
    %337 = vmatprep.subr.bf16.mxu0 0
    %338 = vmatpush1.bf16.msra.mxu0 0
    %339 = vmatprep.mubr.bf16.mxu0 0
    %340 = vmatmul.mubr.bf16.gmra.mrb[0].mxu0 %v104
    %v341 = vpop.f32.mrb[0].mxu0
    %v342 = vadd.f32 %v293, %v341
    %v343 = vpop.f32.mrb[0].mxu0
    %v344 = vpop.f32.mrb[0].mxu0
    %v345 = vadd.f32 %v296, %v344
    %v346 = vpop.f32.mrb[0].mxu0
    %347 = vmatprep.mubr.bf16.mxu0 0
    %348 = vmatmul.mubr.bf16.gmra.mrb[0].mxu0 %v107
    %v349 = vpop.f32.mrb[0].mxu0
    %v350 = vadd.f32 %v301, %v349
    %v351 = vpop.f32.mrb[0].mxu0
    %v352 = vpop.f32.mrb[0].mxu0
    %v353 = vadd.f32 %v304, %v352
    %v354 = vpop.f32.mrb[0].mxu0
    %355 = vdwg.mxu0
    %v356 = vld [vmem:[%s1] sm:$0xff]
    %v357 = vld [vmem:[%s1 + $0x8] sm:$0xf]
    %v358 = vld [vmem:[%s1 + $0xc] sm:$0xff]
    %v359 = vld [vmem:[%s1 + $0x14] sm:$0xf]
    %v360 = vld [vmem:[%s1 + $0x18] sm:$0xff]
    %v361 = vld [vmem:[%s1 + $0x20] sm:$0xf]
    %v362 = vld [vmem:[%s1 + $0x24] sm:$0xff]
    %v363 = vld [vmem:[%s1 + $0x2c] sm:$0xf]
    %v372 = vunpack.c.l.b16 %v356
    %v373 = vunpack.c.h.b16 %v356
    %v374 = vunpack.c.l.b16 %v357
    %v375 = vunpack.c.l.b16 %v358
    %v376 = vunpack.c.h.b16 %v358
    %v377 = vunpack.c.l.b16 %v359
    %v378 = vunpack.c.l.b16 %v360
    %v379 = vunpack.c.h.b16 %v360
    %v380 = vunpack.c.l.b16 %v361
    %v381 = vunpack.c.l.b16 %v362
    %v382 = vunpack.c.h.b16 %v362
    %v383 = vunpack.c.l.b16 %v363
    %v384 = vpack.c.b16 %v375, %v372
    %v385 = vpack.c.b16 %v376, %v373
    %v386 = vpack.c.b16 %v377, %v374
    %v387 = vpack.c.b16 %v381, %v378
    %v388 = vpack.c.b16 %v382, %v379
    %v389 = vpack.c.b16 %v383, %v380
    %396 = vmatprep.subr.bf16.mxu0 0
    %397 = vmatpush1.bf16.msra.mxu0 %v210
    %398 = vmatprep.subr.bf16.mxu0 0
    %399 = vmatpush1.bf16.msra.mxu0 %v211
    %400 = vmatprep.subr.bf16.mxu0 0
    %401 = vmatpush1.bf16.msra.mxu0 %v212
    %402 = vmatprep.subr.bf16.mxu0 0
    %403 = vmatpush1.bf16.msra.mxu0 %v213
    %404 = vmatprep.subr.bf16.mxu0 0
    %405 = vmatpush1.bf16.msra.mxu0 %v214
    %406 = vmatprep.subr.bf16.mxu0 0
    %407 = vmatpush1.bf16.msra.mxu0 %v215
    %408 = vmatprep.subr.bf16.mxu0 0
    %409 = vmatpush1.bf16.msra.mxu0 %v216
    %410 = vmatprep.subr.bf16.mxu0 0
    %411 = vmatpush1.bf16.msra.mxu0 %v217
    %412 = vmatprep.subr.bf16.mxu0 0
    %413 = vmatpush1.bf16.msra.mxu0 %v218
    %414 = vmatprep.subr.bf16.mxu0 0
    %415 = vmatpush1.bf16.msra.mxu0 %v219
    %416 = vmatprep.subr.bf16.mxu0 0
    %417 = vmatpush1.bf16.msra.mxu0 %v220
    %418 = vmatprep.subr.bf16.mxu0 0
    %419 = vmatpush1.bf16.msra.mxu0 %v221
    %420 = vmatprep.subr.bf16.mxu0 0
    %421 = vmatpush1.bf16.msra.mxu0 %v222
    %422 = vmatprep.subr.bf16.mxu0 0
    %423 = vmatpush1.bf16.msra.mxu0 %v223
    %424 = vmatprep.subr.bf16.mxu0 0
    %425 = vmatpush1.bf16.msra.mxu0 %v224
    %426 = vmatprep.subr.bf16.mxu0 0
    %427 = vmatpush1.bf16.msra.mxu0 %v225
    %428 = vmatprep.mubr.bf16.mxu0 %v385
    %429 = vmatmul.mubr.bf16.gmra.mrb[0].mxu0 %v384
    %v430 = vpop.f32.mrb[0].mxu0
    %v431 = vadd.f32 %v80, %v430
    %v432 = vpop.f32.mrb[0].mxu0
    %v433 = vpop.f32.mrb[0].mxu0
    %v434 = vadd.f32 %v80, %v433
    %v435 = vpop.f32.mrb[0].mxu0
    %436 = vmatprep.mubr.bf16.mxu0 %v388
    %437 = vmatmul.mubr.bf16.gmra.mrb[0].mxu0 %v387
    %v438 = vpop.f32.mrb[0].mxu0
    %v439 = vadd.f32 %v80, %v438
    %v440 = vpop.f32.mrb[0].mxu0
    %v441 = vpop.f32.mrb[0].mxu0
    %v442 = vadd.f32 %v80, %v441
    %v443 = vpop.f32.mrb[0].mxu0
    %444 = vdwg.mxu0
    %445 = vmatprep.subr.bf16.mxu0 0
    %446 = vmatpush1.bf16.msra.mxu0 %v226
    %447 = vmatprep.subr.bf16.mxu0 0
    %448 = vmatpush1.bf16.msra.mxu0 %v227
    %449 = vmatprep.subr.bf16.mxu0 0
    %450 = vmatpush1.bf16.msra.mxu0 %v228
    %451 = vmatprep.subr.bf16.mxu0 0
    %452 = vmatpush1.bf16.msra.mxu0 %v229
    %453 = vmatprep.subr.bf16.mxu0 0
    %454 = vmatpush1.bf16.msra.mxu0 %v230
    %455 = vmatprep.subr.bf16.mxu0 0
    %456 = vmatpush1.bf16.msra.mxu0 %v231
    %457 = vmatprep.subr.bf16.mxu0 0
    %458 = vmatpush1.bf16.msra.mxu0 %v232
    %459 = vmatprep.subr.bf16.mxu0 0
    %460 = vmatpush1.bf16.msra.mxu0 %v233
    %461 = vmatprep.subr.bf16.mxu0 0
    %462 = vmatpush1.bf16.msra.mxu0 0
    %463 = vmatprep.subr.bf16.mxu0 0
    %464 = vmatpush1.bf16.msra.mxu0 0
    %465 = vmatprep.subr.bf16.mxu0 0
    %466 = vmatpush1.bf16.msra.mxu0 0
    %467 = vmatprep.subr.bf16.mxu0 0
    %468 = vmatpush1.bf16.msra.mxu0 0
    %469 = vmatprep.subr.bf16.mxu0 0
    %470 = vmatpush1.bf16.msra.mxu0 0
    %471 = vmatprep.subr.bf16.mxu0 0
    %472 = vmatpush1.bf16.msra.mxu0 0
    %473 = vmatprep.subr.bf16.mxu0 0
    %474 = vmatpush1.bf16.msra.mxu0 0
    %475 = vmatprep.subr.bf16.mxu0 0
    %476 = vmatpush1.bf16.msra.mxu0 0
    %477 = vmatprep.mubr.bf16.mxu0 0
    %478 = vmatmul.mubr.bf16.gmra.mrb[0].mxu0 %v386
    %v479 = vpop.f32.mrb[0].mxu0
    %v480 = vadd.f32 %v431, %v479
    %v481 = vpop.f32.mrb[0].mxu0
    %v482 = vpop.f32.mrb[0].mxu0
    %v483 = vadd.f32 %v434, %v482
    %v484 = vpop.f32.mrb[0].mxu0
    %485 = vmatprep.mubr.bf16.mxu0 0
    %486 = vmatmul.mubr.bf16.gmra.mrb[0].mxu0 %v389
    %v487 = vpop.f32.mrb[0].mxu0
    %v488 = vadd.f32 %v439, %v487
    %v489 = vpop.f32.mrb[0].mxu0
    %v490 = vpop.f32.mrb[0].mxu0
    %v491 = vadd.f32 %v442, %v490
    %v492 = vpop.f32.mrb[0].mxu0
    %493 = vdwg.mxu0
    %v494 = vsub.f32 0.0, %v342
    %v495 = vsub.f32 0.0, %v345
    %v496 = vsub.f32 0.0, %v350
    %v497 = vsub.f32 0.0, %v353
    %v498 = vmul.f32 %v494, 1.442695
    %v499 = vpow.pop %v498
    %v500 = vmul.f32 %v495, 1.442695
    %v501 = vpow.pop %v500
    %v502 = vmul.f32 %v496, 1.442695
    %v503 = vpow.pop %v502
    %v504 = vmul.f32 %v497, 1.442695
    %v505 = vpow.pop %v504
    %v506 = vadd.f32 %v499, 1.0
    %v507 = vadd.f32 %v501, 1.0
    %v508 = vadd.f32 %v503, 1.0
    %v509 = vadd.f32 %v505, 1.0
    %v510 = vrcp.pop %v506
    %v511 = vrcp.pop %v507
    %v512 = vrcp.pop %v508
    %v513 = vrcp.pop %v509
    %v514 = vmul.f32 %v342, %v510
    %v515 = vmul.f32 %v345, %v511
    %v516 = vmul.f32 %v350, %v512
    %v517 = vmul.f32 %v353, %v513
    %v518 = vsub.f32 0.0, %v480
    %v519 = vsub.f32 0.0, %v483
    %v520 = vsub.f32 0.0, %v488
    %v521 = vsub.f32 0.0, %v491
    %v522 = vmul.f32 %v518, 1.442695
    %v523 = vpow.pop %v522
    %v524 = vmul.f32 %v519, 1.442695
    %v525 = vpow.pop %v524
    %v526 = vmul.f32 %v520, 1.442695
    %v527 = vpow.pop %v526
    %v528 = vmul.f32 %v521, 1.442695
    %v529 = vpow.pop %v528
    %v530 = vadd.f32 %v523, 1.0
    %v531 = vadd.f32 %v525, 1.0
    %v532 = vadd.f32 %v527, 1.0
    %v533 = vadd.f32 %v529, 1.0
    %v534 = vrcp.pop %v530
    %v535 = vrcp.pop %v531
    %v536 = vrcp.pop %v532
    %v537 = vrcp.pop %v533
    %v538 = vmul.f32 %v480, %v534
    %v539 = vmul.f32 %v483, %v535
    %v540 = vmul.f32 %v488, %v536
    %v541 = vmul.f32 %v491, %v537
    %v542 = vsub.f32 %v514, %v538
    %v543 = vsub.f32 %v515, %v539
    %v544 = vsub.f32 %v516, %v540
    %v545 = vsub.f32 %v517, %v541
    %v546 = vand.u32 2147483647, %v542
    %v547 = vand.u32 2147483647, %v543
    %v548 = vand.u32 2147483647, %v544
    %v549 = vand.u32 2147483647, %v545
    %v550 = vadd.f32 %v546, %v547
    %v551 = vadd.f32 %v550, %v548
    %v552 = vadd.f32 %v551, %v549
    %553 = vadd.xlane.f32.xlu0 %v552
    %v554 = vpop.xlane.xlu0 %553
    %v555 = vrot.slane %v554, 4
    %v556 = vadd.f32 %v554, %v555
    %v557 = vrot.slane %v556, 2
    %v558 = vadd.f32 %v556, %v557
    %v559 = vrot.slane %v558, 1
    %v560 = vadd.f32 %v558, %v559
    %s561 = vtos %v560
    %s562 = scalar_lea.smem [#allocation2], 0
    %563 = sst [smem:[%s562]] %s561
    // Predicated region
    $region18: #{effi_perceptual_loss.3} parent=1 // pred_check
      _
    $region19: #{effi_perceptual_loss.3} parent=1 // pred_check_branch
      %565 = sbr.rel (0) target = $region21
    $region20: #{effi_perceptual_loss.3} parent=1 // pred_region
      %s567 = ssub.s32 16, 16
      %568 = vsyncadd [#allocation3], %s567
      %571 = dma.smem_to_hbm [#allocation2], 16, %s4, [#allocation3]
    $region21: #{effi_perceptual_loss.3} parent=1 // pred_fallthru
      _
    // Predicated region
    $region22: #{effi_perceptual_loss.3} parent=1 // pred_check
      _
    $region23: #{effi_perceptual_loss.3} parent=1 // pred_check_branch
      %573 = sbr.rel (0) target = $region25
    $region24: #{effi_perceptual_loss.3} parent=1 // pred_region
      %574 = dma.done [#allocation3], 16
    $region25: #{effi_perceptual_loss.3} parent=1 // pred_fallthru
      _
    %575 = sfence
    %576 = vsyncpa [#allocation3], 1

</llo_original>
